<compile_context>
chip_gen: v5e
topology: v5e:2x2
jax: 0.10.0
libtpu: 0.0.40
codegen_flags: <defaults>
</compile_context>

<pallas_src>
import functools

import jax
import jax.numpy as jnp
from jax.experimental import pallas as pl
from jax.experimental.pallas import tpu as pltpu


def _round_up(x, m):
    return (x + m - 1) // m * m


def _conv3x3_kernel(x_ref, w_ref, o_ref, *, th, w_out, ksize, cin, cout):
    """One (batch, H-tile) grid step of a stride-1 'same' 2-D convolution.

    x_ref: (1, Cin, Hp, Wp)   zero-padded image of batch n; constant index_map
                              over the H-tile axis so it is DMA'd once per n
                              and stays VMEM resident.
    w_ref: (KH*KW*Cout*Cin,)  flattened conv weight in SMEM (scalar reads).
    o_ref: (1, Cout, th, W)   output tile, already NCHW-shaped.
    """
    j = pl.program_id(1)
    row0 = pl.multiple_of(j * th, th)                    # th is a multiple of 8
    # Halo slice: padded rows [j*th, j*th + th + ksize - 1).
    halo = x_ref[0, :, pl.ds(row0, th + ksize - 1), :]   # (Cin, th+2, Wp)

    accs = [jnp.zeros((th, w_out), jnp.float32) for _ in range(cout)]
    for kh in range(ksize):
        for kw in range(ksize):
            taps = halo[:, kh:kh + th, kw:kw + w_out]    # (Cin, th, W)
            base = (kh * ksize + kw) * cout * cin
            for ci in range(cin):
                tap = taps[ci]                           # (th, W)
                for o in range(cout):
                    w_s = w_ref[base + o * cin + ci]     # scalar from SMEM
                    accs[o] = accs[o] + w_s * tap

    for o in range(cout):
        o_ref[0, o] = accs[o].astype(o_ref.dtype)


@functools.partial(jax.jit, static_argnames=("filter_size", "stride"))
def conv_norm_layer_forward(x_nchw, weight_oihw, *, filter_size=3, stride=1):
    """Pallas implementation of ConvNormLayer.forward (dcn_v2=False).

    x_nchw:      (N, Cin, H, W)      float32
    weight_oihw: (Cout, Cin, KH, KW) float32 (PyTorch Conv2d weight layout)
    returns:     (N, Cout, H, W)     float32
    """
    assert stride == 1, "module under test uses stride=1"
    N, Cin, H, W = x_nchw.shape
    Cout = weight_oihw.shape[0]
    KH = KW = filter_size
    pad = (filter_size - 1) // 2

    # H-tile: multiple of 8; grows with H to amortize per-step overhead while
    # keeping the (double-buffered) output block small.
    th = min(64, max(8, _round_up(H // 8, 8)))
    Hb = _round_up(H, th)            # rows actually computed (>= H, sliced off)
    n_h = Hb // th
    Hp, Wp = Hb + 2 * pad, W + 2 * pad

    # Wrapper-side glue reduced to a single spatial zero-pad (no transposes).
    # TODO(synk): fold the zero padding into the kernel via edge-masked taps
    # to drop this extra HBM round trip of the activation.
    x_pad = jnp.pad(
        x_nchw, ((0, 0), (0, 0), (pad, pad + (Hb - H)), (pad, pad)))

    # Flatten weight to scalars for SMEM: index = ((kh*KW + kw)*Cout + o)*Cin + ci.
    w_flat = jnp.transpose(weight_oihw, (2, 3, 0, 1)).reshape(-1)

    kernel = functools.partial(
        _conv3x3_kernel, th=th, w_out=W, ksize=filter_size, cin=Cin, cout=Cout)

    x_block_bytes = Cin * Hp * Wp * 4
    o_block_bytes = Cout * th * W * 4
    vmem_limit = int(min(32 * 2 ** 20,
                         max(8 * 2 ** 20, 8 * (x_block_bytes + o_block_bytes))))

    cost = pl.CostEstimate(
        flops=2 * N * Hb * W * KH * KW * Cin * Cout,
        transcendentals=0,
        bytes_accessed=(N * Cin * Hp * Wp + int(w_flat.size)
                        + N * Cout * Hb * W) * 4,
    )

    out = pl.pallas_call(
        kernel,
        out_shape=jax.ShapeDtypeStruct((N, Cout, Hb, W), x_nchw.dtype),
        grid_spec=pltpu.PrefetchScalarGridSpec(
            num_scalar_prefetch=0,
            grid=(N, n_h),
            in_specs=[
                # Whole padded image of batch n; constant in j so it is DMA'd
                # once per batch and kept VMEM resident across H tiles.
                # TODO(synk): for very large H*W (v7x's 64 MiB VMEM) switch to
                # halo'd H-tile blocks via manual pltpu.make_async_copy.
                pl.BlockSpec((1, Cin, Hp, Wp), lambda n, j: (n, 0, 0, 0)),
                # All KH*KW*Cout*Cin weight scalars live in SMEM.
                pl.BlockSpec(memory_space=pltpu.MemorySpace.SMEM),
            ],
            out_specs=pl.BlockSpec((1, Cout, th, W), lambda n, j: (n, 0, j, 0)),
        ),
        compiler_params=pltpu.CompilerParams(
            dimension_semantics=("parallel", "parallel"),
            vmem_limit_bytes=vmem_limit,
        ),
        cost_estimate=cost,
    )(x_pad, w_flat)

    return out[:, :, :H, :]


def make_xavier_normal_weight(key, ch_out, ch_in, kh, kw, gain=1.0):
    # torch.nn.init.xavier_normal_ on a Conv2d weight (Cout, Cin, KH, KW):
    # std = gain * sqrt(2 / (fan_in + fan_out)).
    fan_in = ch_in * kh * kw
    fan_out = ch_out * kh * kw
    std = gain * (2.0 / (fan_in + fan_out)) ** 0.5
    return std * jax.random.normal(key, (ch_out, ch_in, kh, kw), jnp.float32)


if __name__ == "__main__":
    ch_in, ch_out, filter_size, stride = 3, 2, 3, 1
    N, H, W = 2, 16, 16

    key = jax.random.PRNGKey(0)
    kx, kw_key = jax.random.split(key)
    x = jax.random.normal(kx, (N, ch_in, H, W), jnp.float32)
    weight = make_xavier_normal_weight(kw_key, ch_out, ch_in,
                                       filter_size, filter_size)

    out = conv_norm_layer_forward(x, weight,
                                  filter_size=filter_size, stride=stride)
    out = jax.block_until_ready(out)

    # Sanity check against XLA's conv (same NCHW/OIHW semantics as PyTorch).
    ref = jax.lax.conv_general_dilated(
        x, weight, window_strides=(1, 1), padding=((1, 1), (1, 1)),
        dimension_numbers=("NCHW", "OIHW", "NCHW"),
        precision=jax.lax.Precision.HIGHEST)
    assert out.shape == (N, ch_out, H, W)
    assert jnp.allclose(out, ref, atol=1e-5, rtol=1e-5)

    print("KERNEL_OK")
</pallas_src>

<mosaic_0001>
module attributes {stable_mosaic.version = 11 : i64} {
  func.func @_conv3x3_kernel(%arg0: i32, %arg1: i32, %arg2: memref<1x3x18x18xf32, #tpu.memory_space<vmem>>, %arg3: memref<54xf32, #tpu.memory_space<smem>>, %arg4: memref<1x2x8x16xf32, #tpu.memory_space<vmem>>) attributes {dimension_semantics = [#tpu.dimension_semantics<parallel>, #tpu.dimension_semantics<parallel>], iteration_bounds = array<i64: 2, 2>, scalar_prefetch = 0 : i64, scratch_operands = 0 : i64, tpu.core_type = #tpu.core_type<tc>, window_params = [{transform_indices = @transform_0, window_bounds = array<i64: 1, 3, 18, 18>}, {transform_indices = @transform_1, window_bounds = array<i64: 54>}, {transform_indices = @transform_2, window_bounds = array<i64: 1, 2, 8, 16>}]} {
    %c8_i32 = arith.constant 8 : i32
    %0 = arith.muli %arg1, %c8_i32 : i32
    %1 = tpu.assume_multiple %0, 8 : i32
    %c0 = arith.constant 0 : index
    %c0_0 = arith.constant 0 : index
    %2 = arith.index_cast %1 : i32 to index
    %c0_1 = arith.constant 0 : index
    %3 = vector.load %arg2[%c0, %c0_0, %2, %c0_1] : memref<1x3x18x18xf32, #tpu.memory_space<vmem>>, vector<1x3x10x18xf32>
    %4 = vector.shape_cast %3 : vector<1x3x10x18xf32> to vector<3x10x18xf32>
    %cst = arith.constant 0.000000e+00 : f32
    %5 = vector.broadcast %cst : f32 to vector<8x16xf32>
    %cst_2 = arith.constant 0.000000e+00 : f32
    %6 = vector.broadcast %cst_2 : f32 to vector<8x16xf32>
    %7 = vector.extract_strided_slice %4 {offsets = [0, 0, 0], sizes = [3, 8, 16], strides = [1, 1, 1]} : vector<3x10x18xf32> to vector<3x8x16xf32>
    %8 = vector.extract_strided_slice %7 {offsets = [0, 0, 0], sizes = [1, 8, 16], strides = [1, 1, 1]} : vector<3x8x16xf32> to vector<1x8x16xf32>
    %9 = vector.shape_cast %8 : vector<1x8x16xf32> to vector<8x16xf32>
    %c0_3 = arith.constant 0 : index
    %10 = memref.load %arg3[%c0_3] : memref<54xf32, #tpu.memory_space<smem>>
    %11 = vector.broadcast %10 : f32 to vector<8x16xf32>
    %12 = arith.mulf %11, %9 : vector<8x16xf32>
    %13 = arith.addf %5, %12 : vector<8x16xf32>
    %c3 = arith.constant 3 : index
    %14 = memref.load %arg3[%c3] : memref<54xf32, #tpu.memory_space<smem>>
    %15 = vector.broadcast %14 : f32 to vector<8x16xf32>
    %16 = arith.mulf %15, %9 : vector<8x16xf32>
    %17 = arith.addf %6, %16 : vector<8x16xf32>
    %18 = vector.extract_strided_slice %7 {offsets = [1, 0, 0], sizes = [1, 8, 16], strides = [1, 1, 1]} : vector<3x8x16xf32> to vector<1x8x16xf32>
    %19 = vector.shape_cast %18 : vector<1x8x16xf32> to vector<8x16xf32>
    %c1 = arith.constant 1 : index
    %20 = memref.load %arg3[%c1] : memref<54xf32, #tpu.memory_space<smem>>
    %21 = vector.broadcast %20 : f32 to vector<8x16xf32>
    %22 = arith.mulf %21, %19 : vector<8x16xf32>
    %23 = arith.addf %13, %22 : vector<8x16xf32>
    %c4 = arith.constant 4 : index
    %24 = memref.load %arg3[%c4] : memref<54xf32, #tpu.memory_space<smem>>
    %25 = vector.broadcast %24 : f32 to vector<8x16xf32>
    %26 = arith.mulf %25, %19 : vector<8x16xf32>
    %27 = arith.addf %17, %26 : vector<8x16xf32>
    %28 = vector.extract_strided_slice %7 {offsets = [2, 0, 0], sizes = [1, 8, 16], strides = [1, 1, 1]} : vector<3x8x16xf32> to vector<1x8x16xf32>
    %29 = vector.shape_cast %28 : vector<1x8x16xf32> to vector<8x16xf32>
    %c2 = arith.constant 2 : index
    %30 = memref.load %arg3[%c2] : memref<54xf32, #tpu.memory_space<smem>>
    %31 = vector.broadcast %30 : f32 to vector<8x16xf32>
    %32 = arith.mulf %31, %29 : vector<8x16xf32>
    %33 = arith.addf %23, %32 : vector<8x16xf32>
    %c5 = arith.constant 5 : index
    %34 = memref.load %arg3[%c5] : memref<54xf32, #tpu.memory_space<smem>>
    %35 = vector.broadcast %34 : f32 to vector<8x16xf32>
    %36 = arith.mulf %35, %29 : vector<8x16xf32>
    %37 = arith.addf %27, %36 : vector<8x16xf32>
    %38 = vector.extract_strided_slice %4 {offsets = [0, 0, 1], sizes = [3, 8, 16], strides = [1, 1, 1]} : vector<3x10x18xf32> to vector<3x8x16xf32>
    %39 = vector.extract_strided_slice %38 {offsets = [0, 0, 0], sizes = [1, 8, 16], strides = [1, 1, 1]} : vector<3x8x16xf32> to vector<1x8x16xf32>
    %40 = vector.shape_cast %39 : vector<1x8x16xf32> to vector<8x16xf32>
    %c6 = arith.constant 6 : index
    %41 = memref.load %arg3[%c6] : memref<54xf32, #tpu.memory_space<smem>>
    %42 = vector.broadcast %41 : f32 to vector<8x16xf32>
    %43 = arith.mulf %42, %40 : vector<8x16xf32>
    %44 = arith.addf %33, %43 : vector<8x16xf32>
    %c9 = arith.constant 9 : index
    %45 = memref.load %arg3[%c9] : memref<54xf32, #tpu.memory_space<smem>>
    %46 = vector.broadcast %45 : f32 to vector<8x16xf32>
    %47 = arith.mulf %46, %40 : vector<8x16xf32>
    %48 = arith.addf %37, %47 : vector<8x16xf32>
    %49 = vector.extract_strided_slice %38 {offsets = [1, 0, 0], sizes = [1, 8, 16], strides = [1, 1, 1]} : vector<3x8x16xf32> to vector<1x8x16xf32>
    %50 = vector.shape_cast %49 : vector<1x8x16xf32> to vector<8x16xf32>
    %c7 = arith.constant 7 : index
    %51 = memref.load %arg3[%c7] : memref<54xf32, #tpu.memory_space<smem>>
    %52 = vector.broadcast %51 : f32 to vector<8x16xf32>
    %53 = arith.mulf %52, %50 : vector<8x16xf32>
    %54 = arith.addf %44, %53 : vector<8x16xf32>
    %c10 = arith.constant 10 : index
    %55 = memref.load %arg3[%c10] : memref<54xf32, #tpu.memory_space<smem>>
    %56 = vector.broadcast %55 : f32 to vector<8x16xf32>
    %57 = arith.mulf %56, %50 : vector<8x16xf32>
    %58 = arith.addf %48, %57 : vector<8x16xf32>
    %59 = vector.extract_strided_slice %38 {offsets = [2, 0, 0], sizes = [1, 8, 16], strides = [1, 1, 1]} : vector<3x8x16xf32> to vector<1x8x16xf32>
    %60 = vector.shape_cast %59 : vector<1x8x16xf32> to vector<8x16xf32>
    %c8 = arith.constant 8 : index
    %61 = memref.load %arg3[%c8] : memref<54xf32, #tpu.memory_space<smem>>
    %62 = vector.broadcast %61 : f32 to vector<8x16xf32>
    %63 = arith.mulf %62, %60 : vector<8x16xf32>
    %64 = arith.addf %54, %63 : vector<8x16xf32>
    %c11 = arith.constant 11 : index
    %65 = memref.load %arg3[%c11] : memref<54xf32, #tpu.memory_space<smem>>
    %66 = vector.broadcast %65 : f32 to vector<8x16xf32>
    %67 = arith.mulf %66, %60 : vector<8x16xf32>
    %68 = arith.addf %58, %67 : vector<8x16xf32>
    %69 = vector.extract_strided_slice %4 {offsets = [0, 0, 2], sizes = [3, 8, 16], strides = [1, 1, 1]} : vector<3x10x18xf32> to vector<3x8x16xf32>
    %70 = vector.extract_strided_slice %69 {offsets = [0, 0, 0], sizes = [1, 8, 16], strides = [1, 1, 1]} : vector<3x8x16xf32> to vector<1x8x16xf32>
    %71 = vector.shape_cast %70 : vector<1x8x16xf32> to vector<8x16xf32>
    %c12 = arith.constant 12 : index
    %72 = memref.load %arg3[%c12] : memref<54xf32, #tpu.memory_space<smem>>
    %73 = vector.broadcast %72 : f32 to vector<8x16xf32>
    %74 = arith.mulf %73, %71 : vector<8x16xf32>
    %75 = arith.addf %64, %74 : vector<8x16xf32>
    %c15 = arith.constant 15 : index
    %76 = memref.load %arg3[%c15] : memref<54xf32, #tpu.memory_space<smem>>
    %77 = vector.broadcast %76 : f32 to vector<8x16xf32>
    %78 = arith.mulf %77, %71 : vector<8x16xf32>
    %79 = arith.addf %68, %78 : vector<8x16xf32>
    %80 = vector.extract_strided_slice %69 {offsets = [1, 0, 0], sizes = [1, 8, 16], strides = [1, 1, 1]} : vector<3x8x16xf32> to vector<1x8x16xf32>
    %81 = vector.shape_cast %80 : vector<1x8x16xf32> to vector<8x16xf32>
    %c13 = arith.constant 13 : index
    %82 = memref.load %arg3[%c13] : memref<54xf32, #tpu.memory_space<smem>>
    %83 = vector.broadcast %82 : f32 to vector<8x16xf32>
    %84 = arith.mulf %83, %81 : vector<8x16xf32>
    %85 = arith.addf %75, %84 : vector<8x16xf32>
    %c16 = arith.constant 16 : index
    %86 = memref.load %arg3[%c16] : memref<54xf32, #tpu.memory_space<smem>>
    %87 = vector.broadcast %86 : f32 to vector<8x16xf32>
    %88 = arith.mulf %87, %81 : vector<8x16xf32>
    %89 = arith.addf %79, %88 : vector<8x16xf32>
    %90 = vector.extract_strided_slice %69 {offsets = [2, 0, 0], sizes = [1, 8, 16], strides = [1, 1, 1]} : vector<3x8x16xf32> to vector<1x8x16xf32>
    %91 = vector.shape_cast %90 : vector<1x8x16xf32> to vector<8x16xf32>
    %c14 = arith.constant 14 : index
    %92 = memref.load %arg3[%c14] : memref<54xf32, #tpu.memory_space<smem>>
    %93 = vector.broadcast %92 : f32 to vector<8x16xf32>
    %94 = arith.mulf %93, %91 : vector<8x16xf32>
    %95 = arith.addf %85, %94 : vector<8x16xf32>
    %c17 = arith.constant 17 : index
    %96 = memref.load %arg3[%c17] : memref<54xf32, #tpu.memory_space<smem>>
    %97 = vector.broadcast %96 : f32 to vector<8x16xf32>
    %98 = arith.mulf %97, %91 : vector<8x16xf32>
    %99 = arith.addf %89, %98 : vector<8x16xf32>
    %100 = vector.extract_strided_slice %4 {offsets = [0, 1, 0], sizes = [3, 8, 16], strides = [1, 1, 1]} : vector<3x10x18xf32> to vector<3x8x16xf32>
    %101 = vector.extract_strided_slice %100 {offsets = [0, 0, 0], sizes = [1, 8, 16], strides = [1, 1, 1]} : vector<3x8x16xf32> to vector<1x8x16xf32>
    %102 = vector.shape_cast %101 : vector<1x8x16xf32> to vector<8x16xf32>
    %c18 = arith.constant 18 : index
    %103 = memref.load %arg3[%c18] : memref<54xf32, #tpu.memory_space<smem>>
    %104 = vector.broadcast %103 : f32 to vector<8x16xf32>
    %105 = arith.mulf %104, %102 : vector<8x16xf32>
    %106 = arith.addf %95, %105 : vector<8x16xf32>
    %c21 = arith.constant 21 : index
    %107 = memref.load %arg3[%c21] : memref<54xf32, #tpu.memory_space<smem>>
    %108 = vector.broadcast %107 : f32 to vector<8x16xf32>
    %109 = arith.mulf %108, %102 : vector<8x16xf32>
    %110 = arith.addf %99, %109 : vector<8x16xf32>
    %111 = vector.extract_strided_slice %100 {offsets = [1, 0, 0], sizes = [1, 8, 16], strides = [1, 1, 1]} : vector<3x8x16xf32> to vector<1x8x16xf32>
    %112 = vector.shape_cast %111 : vector<1x8x16xf32> to vector<8x16xf32>
    %c19 = arith.constant 19 : index
    %113 = memref.load %arg3[%c19] : memref<54xf32, #tpu.memory_space<smem>>
    %114 = vector.broadcast %113 : f32 to vector<8x16xf32>
    %115 = arith.mulf %114, %112 : vector<8x16xf32>
    %116 = arith.addf %106, %115 : vector<8x16xf32>
    %c22 = arith.constant 22 : index
    %117 = memref.load %arg3[%c22] : memref<54xf32, #tpu.memory_space<smem>>
    %118 = vector.broadcast %117 : f32 to vector<8x16xf32>
    %119 = arith.mulf %118, %112 : vector<8x16xf32>
    %120 = arith.addf %110, %119 : vector<8x16xf32>
    %121 = vector.extract_strided_slice %100 {offsets = [2, 0, 0], sizes = [1, 8, 16], strides = [1, 1, 1]} : vector<3x8x16xf32> to vector<1x8x16xf32>
    %122 = vector.shape_cast %121 : vector<1x8x16xf32> to vector<8x16xf32>
    %c20 = arith.constant 20 : index
    %123 = memref.load %arg3[%c20] : memref<54xf32, #tpu.memory_space<smem>>
    %124 = vector.broadcast %123 : f32 to vector<8x16xf32>
    %125 = arith.mulf %124, %122 : vector<8x16xf32>
    %126 = arith.addf %116, %125 : vector<8x16xf32>
    %c23 = arith.constant 23 : index
    %127 = memref.load %arg3[%c23] : memref<54xf32, #tpu.memory_space<smem>>
    %128 = vector.broadcast %127 : f32 to vector<8x16xf32>
    %129 = arith.mulf %128, %122 : vector<8x16xf32>
    %130 = arith.addf %120, %129 : vector<8x16xf32>
    %131 = vector.extract_strided_slice %4 {offsets = [0, 1, 1], sizes = [3, 8, 16], strides = [1, 1, 1]} : vector<3x10x18xf32> to vector<3x8x16xf32>
    %132 = vector.extract_strided_slice %131 {offsets = [0, 0, 0], sizes = [1, 8, 16], strides = [1, 1, 1]} : vector<3x8x16xf32> to vector<1x8x16xf32>
    %133 = vector.shape_cast %132 : vector<1x8x16xf32> to vector<8x16xf32>
    %c24 = arith.constant 24 : index
    %134 = memref.load %arg3[%c24] : memref<54xf32, #tpu.memory_space<smem>>
    %135 = vector.broadcast %134 : f32 to vector<8x16xf32>
    %136 = arith.mulf %135, %133 : vector<8x16xf32>
    %137 = arith.addf %126, %136 : vector<8x16xf32>
    %c27 = arith.constant 27 : index
    %138 = memref.load %arg3[%c27] : memref<54xf32, #tpu.memory_space<smem>>
    %139 = vector.broadcast %138 : f32 to vector<8x16xf32>
    %140 = arith.mulf %139, %133 : vector<8x16xf32>
    %141 = arith.addf %130, %140 : vector<8x16xf32>
    %142 = vector.extract_strided_slice %131 {offsets = [1, 0, 0], sizes = [1, 8, 16], strides = [1, 1, 1]} : vector<3x8x16xf32> to vector<1x8x16xf32>
    %143 = vector.shape_cast %142 : vector<1x8x16xf32> to vector<8x16xf32>
    %c25 = arith.constant 25 : index
    %144 = memref.load %arg3[%c25] : memref<54xf32, #tpu.memory_space<smem>>
    %145 = vector.broadcast %144 : f32 to vector<8x16xf32>
    %146 = arith.mulf %145, %143 : vector<8x16xf32>
    %147 = arith.addf %137, %146 : vector<8x16xf32>
    %c28 = arith.constant 28 : index
    %148 = memref.load %arg3[%c28] : memref<54xf32, #tpu.memory_space<smem>>
    %149 = vector.broadcast %148 : f32 to vector<8x16xf32>
    %150 = arith.mulf %149, %143 : vector<8x16xf32>
    %151 = arith.addf %141, %150 : vector<8x16xf32>
    %152 = vector.extract_strided_slice %131 {offsets = [2, 0, 0], sizes = [1, 8, 16], strides = [1, 1, 1]} : vector<3x8x16xf32> to vector<1x8x16xf32>
    %153 = vector.shape_cast %152 : vector<1x8x16xf32> to vector<8x16xf32>
    %c26 = arith.constant 26 : index
    %154 = memref.load %arg3[%c26] : memref<54xf32, #tpu.memory_space<smem>>
    %155 = vector.broadcast %154 : f32 to vector<8x16xf32>
    %156 = arith.mulf %155, %153 : vector<8x16xf32>
    %157 = arith.addf %147, %156 : vector<8x16xf32>
    %c29 = arith.constant 29 : index
    %158 = memref.load %arg3[%c29] : memref<54xf32, #tpu.memory_space<smem>>
    %159 = vector.broadcast %158 : f32 to vector<8x16xf32>
    %160 = arith.mulf %159, %153 : vector<8x16xf32>
    %161 = arith.addf %151, %160 : vector<8x16xf32>
    %162 = vector.extract_strided_slice %4 {offsets = [0, 1, 2], sizes = [3, 8, 16], strides = [1, 1, 1]} : vector<3x10x18xf32> to vector<3x8x16xf32>
    %163 = vector.extract_strided_slice %162 {offsets = [0, 0, 0], sizes = [1, 8, 16], strides = [1, 1, 1]} : vector<3x8x16xf32> to vector<1x8x16xf32>
    %164 = vector.shape_cast %163 : vector<1x8x16xf32> to vector<8x16xf32>
    %c30 = arith.constant 30 : index
    %165 = memref.load %arg3[%c30] : memref<54xf32, #tpu.memory_space<smem>>
    %166 = vector.broadcast %165 : f32 to vector<8x16xf32>
    %167 = arith.mulf %166, %164 : vector<8x16xf32>
    %168 = arith.addf %157, %167 : vector<8x16xf32>
    %c33 = arith.constant 33 : index
    %169 = memref.load %arg3[%c33] : memref<54xf32, #tpu.memory_space<smem>>
    %170 = vector.broadcast %169 : f32 to vector<8x16xf32>
    %171 = arith.mulf %170, %164 : vector<8x16xf32>
    %172 = arith.addf %161, %171 : vector<8x16xf32>
    %173 = vector.extract_strided_slice %162 {offsets = [1, 0, 0], sizes = [1, 8, 16], strides = [1, 1, 1]} : vector<3x8x16xf32> to vector<1x8x16xf32>
    %174 = vector.shape_cast %173 : vector<1x8x16xf32> to vector<8x16xf32>
    %c31 = arith.constant 31 : index
    %175 = memref.load %arg3[%c31] : memref<54xf32, #tpu.memory_space<smem>>
    %176 = vector.broadcast %175 : f32 to vector<8x16xf32>
    %177 = arith.mulf %176, %174 : vector<8x16xf32>
    %178 = arith.addf %168, %177 : vector<8x16xf32>
    %c34 = arith.constant 34 : index
    %179 = memref.load %arg3[%c34] : memref<54xf32, #tpu.memory_space<smem>>
    %180 = vector.broadcast %179 : f32 to vector<8x16xf32>
    %181 = arith.mulf %180, %174 : vector<8x16xf32>
    %182 = arith.addf %172, %181 : vector<8x16xf32>
    %183 = vector.extract_strided_slice %162 {offsets = [2, 0, 0], sizes = [1, 8, 16], strides = [1, 1, 1]} : vector<3x8x16xf32> to vector<1x8x16xf32>
    %184 = vector.shape_cast %183 : vector<1x8x16xf32> to vector<8x16xf32>
    %c32 = arith.constant 32 : index
    %185 = memref.load %arg3[%c32] : memref<54xf32, #tpu.memory_space<smem>>
    %186 = vector.broadcast %185 : f32 to vector<8x16xf32>
    %187 = arith.mulf %186, %184 : vector<8x16xf32>
    %188 = arith.addf %178, %187 : vector<8x16xf32>
    %c35 = arith.constant 35 : index
    %189 = memref.load %arg3[%c35] : memref<54xf32, #tpu.memory_space<smem>>
    %190 = vector.broadcast %189 : f32 to vector<8x16xf32>
    %191 = arith.mulf %190, %184 : vector<8x16xf32>
    %192 = arith.addf %182, %191 : vector<8x16xf32>
    %193 = vector.extract_strided_slice %4 {offsets = [0, 2, 0], sizes = [3, 8, 16], strides = [1, 1, 1]} : vector<3x10x18xf32> to vector<3x8x16xf32>
    %194 = vector.extract_strided_slice %193 {offsets = [0, 0, 0], sizes = [1, 8, 16], strides = [1, 1, 1]} : vector<3x8x16xf32> to vector<1x8x16xf32>
    %195 = vector.shape_cast %194 : vector<1x8x16xf32> to vector<8x16xf32>
    %c36 = arith.constant 36 : index
    %196 = memref.load %arg3[%c36] : memref<54xf32, #tpu.memory_space<smem>>
    %197 = vector.broadcast %196 : f32 to vector<8x16xf32>
    %198 = arith.mulf %197, %195 : vector<8x16xf32>
    %199 = arith.addf %188, %198 : vector<8x16xf32>
    %c39 = arith.constant 39 : index
    %200 = memref.load %arg3[%c39] : memref<54xf32, #tpu.memory_space<smem>>
    %201 = vector.broadcast %200 : f32 to vector<8x16xf32>
    %202 = arith.mulf %201, %195 : vector<8x16xf32>
    %203 = arith.addf %192, %202 : vector<8x16xf32>
    %204 = vector.extract_strided_slice %193 {offsets = [1, 0, 0], sizes = [1, 8, 16], strides = [1, 1, 1]} : vector<3x8x16xf32> to vector<1x8x16xf32>
    %205 = vector.shape_cast %204 : vector<1x8x16xf32> to vector<8x16xf32>
    %c37 = arith.constant 37 : index
    %206 = memref.load %arg3[%c37] : memref<54xf32, #tpu.memory_space<smem>>
    %207 = vector.broadcast %206 : f32 to vector<8x16xf32>
    %208 = arith.mulf %207, %205 : vector<8x16xf32>
    %209 = arith.addf %199, %208 : vector<8x16xf32>
    %c40 = arith.constant 40 : index
    %210 = memref.load %arg3[%c40] : memref<54xf32, #tpu.memory_space<smem>>
    %211 = vector.broadcast %210 : f32 to vector<8x16xf32>
    %212 = arith.mulf %211, %205 : vector<8x16xf32>
    %213 = arith.addf %203, %212 : vector<8x16xf32>
    %214 = vector.extract_strided_slice %193 {offsets = [2, 0, 0], sizes = [1, 8, 16], strides = [1, 1, 1]} : vector<3x8x16xf32> to vector<1x8x16xf32>
    %215 = vector.shape_cast %214 : vector<1x8x16xf32> to vector<8x16xf32>
    %c38 = arith.constant 38 : index
    %216 = memref.load %arg3[%c38] : memref<54xf32, #tpu.memory_space<smem>>
    %217 = vector.broadcast %216 : f32 to vector<8x16xf32>
    %218 = arith.mulf %217, %215 : vector<8x16xf32>
    %219 = arith.addf %209, %218 : vector<8x16xf32>
    %c41 = arith.constant 41 : index
    %220 = memref.load %arg3[%c41] : memref<54xf32, #tpu.memory_space<smem>>
    %221 = vector.broadcast %220 : f32 to vector<8x16xf32>
    %222 = arith.mulf %221, %215 : vector<8x16xf32>
    %223 = arith.addf %213, %222 : vector<8x16xf32>
    %224 = vector.extract_strided_slice %4 {offsets = [0, 2, 1], sizes = [3, 8, 16], strides = [1, 1, 1]} : vector<3x10x18xf32> to vector<3x8x16xf32>
    %225 = vector.extract_strided_slice %224 {offsets = [0, 0, 0], sizes = [1, 8, 16], strides = [1, 1, 1]} : vector<3x8x16xf32> to vector<1x8x16xf32>
    %226 = vector.shape_cast %225 : vector<1x8x16xf32> to vector<8x16xf32>
    %c42 = arith.constant 42 : index
    %227 = memref.load %arg3[%c42] : memref<54xf32, #tpu.memory_space<smem>>
    %228 = vector.broadcast %227 : f32 to vector<8x16xf32>
    %229 = arith.mulf %228, %226 : vector<8x16xf32>
    %230 = arith.addf %219, %229 : vector<8x16xf32>
    %c45 = arith.constant 45 : index
    %231 = memref.load %arg3[%c45] : memref<54xf32, #tpu.memory_space<smem>>
    %232 = vector.broadcast %231 : f32 to vector<8x16xf32>
    %233 = arith.mulf %232, %226 : vector<8x16xf32>
    %234 = arith.addf %223, %233 : vector<8x16xf32>
    %235 = vector.extract_strided_slice %224 {offsets = [1, 0, 0], sizes = [1, 8, 16], strides = [1, 1, 1]} : vector<3x8x16xf32> to vector<1x8x16xf32>
    %236 = vector.shape_cast %235 : vector<1x8x16xf32> to vector<8x16xf32>
    %c43 = arith.constant 43 : index
    %237 = memref.load %arg3[%c43] : memref<54xf32, #tpu.memory_space<smem>>
    %238 = vector.broadcast %237 : f32 to vector<8x16xf32>
    %239 = arith.mulf %238, %236 : vector<8x16xf32>
    %240 = arith.addf %230, %239 : vector<8x16xf32>
    %c46 = arith.constant 46 : index
    %241 = memref.load %arg3[%c46] : memref<54xf32, #tpu.memory_space<smem>>
    %242 = vector.broadcast %241 : f32 to vector<8x16xf32>
    %243 = arith.mulf %242, %236 : vector<8x16xf32>
    %244 = arith.addf %234, %243 : vector<8x16xf32>
    %245 = vector.extract_strided_slice %224 {offsets = [2, 0, 0], sizes = [1, 8, 16], strides = [1, 1, 1]} : vector<3x8x16xf32> to vector<1x8x16xf32>
    %246 = vector.shape_cast %245 : vector<1x8x16xf32> to vector<8x16xf32>
    %c44 = arith.constant 44 : index
    %247 = memref.load %arg3[%c44] : memref<54xf32, #tpu.memory_space<smem>>
    %248 = vector.broadcast %247 : f32 to vector<8x16xf32>
    %249 = arith.mulf %248, %246 : vector<8x16xf32>
    %250 = arith.addf %240, %249 : vector<8x16xf32>
    %c47 = arith.constant 47 : index
    %251 = memref.load %arg3[%c47] : memref<54xf32, #tpu.memory_space<smem>>
    %252 = vector.broadcast %251 : f32 to vector<8x16xf32>
    %253 = arith.mulf %252, %246 : vector<8x16xf32>
    %254 = arith.addf %244, %253 : vector<8x16xf32>
    %255 = vector.extract_strided_slice %4 {offsets = [0, 2, 2], sizes = [3, 8, 16], strides = [1, 1, 1]} : vector<3x10x18xf32> to vector<3x8x16xf32>
    %256 = vector.extract_strided_slice %255 {offsets = [0, 0, 0], sizes = [1, 8, 16], strides = [1, 1, 1]} : vector<3x8x16xf32> to vector<1x8x16xf32>
    %257 = vector.shape_cast %256 : vector<1x8x16xf32> to vector<8x16xf32>
    %c48 = arith.constant 48 : index
    %258 = memref.load %arg3[%c48] : memref<54xf32, #tpu.memory_space<smem>>
    %259 = vector.broadcast %258 : f32 to vector<8x16xf32>
    %260 = arith.mulf %259, %257 : vector<8x16xf32>
    %261 = arith.addf %250, %260 : vector<8x16xf32>
    %c51 = arith.constant 51 : index
    %262 = memref.load %arg3[%c51] : memref<54xf32, #tpu.memory_space<smem>>
    %263 = vector.broadcast %262 : f32 to vector<8x16xf32>
    %264 = arith.mulf %263, %257 : vector<8x16xf32>
    %265 = arith.addf %254, %264 : vector<8x16xf32>
    %266 = vector.extract_strided_slice %255 {offsets = [1, 0, 0], sizes = [1, 8, 16], strides = [1, 1, 1]} : vector<3x8x16xf32> to vector<1x8x16xf32>
    %267 = vector.shape_cast %266 : vector<1x8x16xf32> to vector<8x16xf32>
    %c49 = arith.constant 49 : index
    %268 = memref.load %arg3[%c49] : memref<54xf32, #tpu.memory_space<smem>>
    %269 = vector.broadcast %268 : f32 to vector<8x16xf32>
    %270 = arith.mulf %269, %267 : vector<8x16xf32>
    %271 = arith.addf %261, %270 : vector<8x16xf32>
    %c52 = arith.constant 52 : index
    %272 = memref.load %arg3[%c52] : memref<54xf32, #tpu.memory_space<smem>>
    %273 = vector.broadcast %272 : f32 to vector<8x16xf32>
    %274 = arith.mulf %273, %267 : vector<8x16xf32>
    %275 = arith.addf %265, %274 : vector<8x16xf32>
    %276 = vector.extract_strided_slice %255 {offsets = [2, 0, 0], sizes = [1, 8, 16], strides = [1, 1, 1]} : vector<3x8x16xf32> to vector<1x8x16xf32>
    %277 = vector.shape_cast %276 : vector<1x8x16xf32> to vector<8x16xf32>
    %c50 = arith.constant 50 : index
    %278 = memref.load %arg3[%c50] : memref<54xf32, #tpu.memory_space<smem>>
    %279 = vector.broadcast %278 : f32 to vector<8x16xf32>
    %280 = arith.mulf %279, %277 : vector<8x16xf32>
    %281 = arith.addf %271, %280 : vector<8x16xf32>
    %c53 = arith.constant 53 : index
    %282 = memref.load %arg3[%c53] : memref<54xf32, #tpu.memory_space<smem>>
    %283 = vector.broadcast %282 : f32 to vector<8x16xf32>
    %284 = arith.mulf %283, %277 : vector<8x16xf32>
    %285 = arith.addf %275, %284 : vector<8x16xf32>
    %c0_4 = arith.constant 0 : index
    %c0_5 = arith.constant 0 : index
    %c0_6 = arith.constant 0 : index
    %c0_7 = arith.constant 0 : index
    %286 = vector.load %arg4[%c0_4, %c0_5, %c0_6, %c0_7] : memref<1x2x8x16xf32, #tpu.memory_space<vmem>>, vector<1x1x8x16xf32>
    %287 = vector.shape_cast %286 : vector<1x1x8x16xf32> to vector<8x16xf32>
    %288 = vector.shape_cast %281 : vector<8x16xf32> to vector<1x1x8x16xf32>
    tpu.vector_store %arg4[%c0_4, %c0_5, %c0_6, %c0_7], %288 {strides = array<i32>} : memref<1x2x8x16xf32, #tpu.memory_space<vmem>>, vector<1x1x8x16xf32>,
    %c0_8 = arith.constant 0 : index
    %c1_9 = arith.constant 1 : index
    %c0_10 = arith.constant 0 : index
    %c0_11 = arith.constant 0 : index
    %289 = vector.load %arg4[%c0_8, %c1_9, %c0_10, %c0_11] : memref<1x2x8x16xf32, #tpu.memory_space<vmem>>, vector<1x1x8x16xf32>
    %290 = vector.shape_cast %289 : vector<1x1x8x16xf32> to vector<8x16xf32>
    %291 = vector.shape_cast %285 : vector<8x16xf32> to vector<1x1x8x16xf32>
    tpu.vector_store %arg4[%c0_8, %c1_9, %c0_10, %c0_11], %291 {strides = array<i32>} : memref<1x2x8x16xf32, #tpu.memory_space<vmem>>, vector<1x1x8x16xf32>,
    return
  }
  func.func @transform_0(%arg0: i32, %arg1: i32) -> (i32, i32, i32, i32) {
    %c0_i32 = arith.constant 0 : i32
    %c0_i32_0 = arith.constant 0 : i32
    %c0_i32_1 = arith.constant 0 : i32
    %c0_i32_2 = arith.constant 0 : i32
    return %arg0, %c0_i32, %c0_i32_0, %c0_i32_1 : i32, i32, i32, i32
  }
  func.func @transform_1(%arg0: i32, %arg1: i32) -> i32 {
    %c0_i32 = arith.constant 0 : i32
    %c0_i32_0 = arith.constant 0 : i32
    return %c0_i32 : i32
  }
  func.func @transform_2(%arg0: i32, %arg1: i32) -> (i32, i32, i32, i32) {
    %c0_i32 = arith.constant 0 : i32
    %c0_i32_0 = arith.constant 0 : i32
    %c0_i32_1 = arith.constant 0 : i32
    return %arg0, %c0_i32, %arg1, %c0_i32_0 : i32, i32, i32, i32
  }
}

</mosaic_0001>

<llo_original>
// kernel: conv_norm_layer_forward.1
$region0: #{conv_norm_layer_forward.1}
  #allocation0 [shape = 'u32[]', space=smem, size = 0x4, offset = 0x4, fixed_abs, tag = 'smem constant byte address 0x4 - core index']
  #allocation1 [shape = 'u32[72,128]{1,0:T(1,128)}', space=vmem, size = 0x9000, scoped, tag = 'internal scratch']
  %s0 = inlined_call_operand.vmem [shape: f32[2,3,18,18], index: 0, kind: input, shape index: {}]
  %s1 = inlined_call_operand.vmem [shape: f32[54], index: 1, kind: input, shape index: {}]
  %s2 = inlined_call_operand.hbm [shape: f32[2,2,16,16], index: 2, kind: output, shape index: {}]
  %s3 = sld [smem:[#allocation0]]
  $region45: #{conv_norm_layer_forward.1} parent=0
    _
  %s5 = ssub.s32 1, %s3
  %s6 = scalar_select 0, %s5, %s3
  $region1: #{conv_norm_layer_forward.1} parent=0
    #allocation2 [shape = 'u8[512]{0}', space=smem, size = 0x200, scoped, tag = 'input window, operand 1, single buffered']
    #allocation3 [shape = 's32[2]{0}', space=sflag, size = 0x8, scoped, tag = 'scoped memory for conv_norm_layer_forward.1']
    #allocation4 [shape = 's32[2]{0}', space=sflag, size = 0x8, scoped, tag = 'scoped memory for conv_norm_layer_forward.1']
    #allocation5 [shape = 'u8[16384]{0}', space=vmem, size = 0x4000, scoped, tag = 'output window, operand 0']
    %7 = vsyncpa [#allocation4], 0
    %8 = vsyncpa [#allocation3], 0
    %s9 = scalar_lea.sflag [#allocation3], 1
    %10 = vsyncpa %s9, 0
    loop: start=0, step=1, limit=6
    $region2: #{conv_norm_layer_forward.1} parent=1 // loop_pre_header
      _
    $region3: #{conv_norm_layer_forward.1} parent=1 // loop_header
      %s12 = sphi 0, %s16
      %p13 = scmp.ge.s32.totalorder %s12, 6
      %s19 = sphi 0, %s31
      %s20 = sphi 0, %s27
      %s21 = sphi 0, %s19
      %s22 = sphi 0, %s20
      %s23 = sphi 0, %s21
      %s24 = sphi 0, %s22
      %s34 = sphi 0, %s36
      %s37 = sphi 0, %s34
      %s38 = sphi 0, %s37
      %s54 = sphi 0, %s38
      %s58 = sphi 0, %s58
      %s60 = sphi 0, %s58
      %s61 = sphi 0, %s60
      %s75 = sphi 0, %s61
      %s83 = sphi 0, %s85
      %s86 = sphi 0, %s83
      %s87 = sphi 0, %s86
      %s103 = sphi 0, %s87
    $region4: #{conv_norm_layer_forward.1} parent=1 // loop_header_branch
      %15 = sbr.rel (%p13) target = $region8
    $region5: #{conv_norm_layer_forward.1} parent=1 // loop_body
      %s17 = ssub.s32 %s12, 1
      %s18 = ssub.s32 %s12, 2
      %s25 = sadd.s32 1, %s20
      %p26 = scmp.ge.s32.totalorder %s25, 2
      %s27 = scalar_select %p26, 0, %s25
      %s28 = sadd.s32 1, %s19
      %s29 = scalar_select %p26, %s28, %s19
      %p30 = scmp.ge.s32.totalorder %s29, 2
      %s31 = scalar_select %p30, 0, %s29
      %s32 = ssub.s32 %s19, %s31
      %p33 = scmp.eq.s32.totalorder %s32, 0
      %s35 = sadd.s32 %s34, 1
      %s36 = scalar_select %p33, %s34, %s35
      %p39 = pneg %p33
      %p40 = scmp.eq.s32.totalorder %s12, 3
      %p41 = por %p39, %p40
      %p42 = scmp.ne.s32.totalorder %s34, %s37
      %p43 = scmp.eq.s32.totalorder %s12, 0
      %p44 = por %p42, %p43
      %p45 = scmp.ne.s32.totalorder %s34, %s37
      %p46 = scmp.eq.s32.totalorder %s17, 3
      %p47 = por %p45, %p46
      %p48 = scmp.ne.s32.totalorder %s37, %s38
      %p49 = scmp.eq.s32.totalorder %s17, 0
      %p50 = por %p48, %p49
      %p51 = scmp.ne.s32.totalorder %s37, %s38
      %p52 = scmp.eq.s32.totalorder %s18, 3
      %p53 = por %p51, %p52
      %p55 = scmp.ne.s32.totalorder %s38, %s54
      %p56 = scmp.eq.s32.totalorder %s18, 0
      %p57 = por %p55, %p56
      %s59 = sadd.s32 %s58, 1
      %p62 = scmp.eq.s32.totalorder %s12, 3
      %p63 = scmp.ne.s32.totalorder %s58, %s60
      %p64 = scmp.eq.s32.totalorder %s12, 0
      %p65 = por %p63, %p64
      %p66 = scmp.ne.s32.totalorder %s58, %s60
      %p67 = scmp.eq.s32.totalorder %s17, 3
      %p68 = por %p66, %p67
      %p69 = scmp.ne.s32.totalorder %s60, %s61
      %p70 = scmp.eq.s32.totalorder %s17, 0
      %p71 = por %p69, %p70
      %p72 = scmp.ne.s32.totalorder %s60, %s61
      %p73 = scmp.eq.s32.totalorder %s18, 3
      %p74 = por %p72, %p73
      %p76 = scmp.ne.s32.totalorder %s61, %s75
      %p77 = scmp.eq.s32.totalorder %s18, 0
      %p78 = por %p76, %p77
      %s79 = ssub.s32 %s19, %s31
      %s80 = ssub.s32 %s20, %s27
      %s81 = sor.u32 %s79, %s80
      %p82 = scmp.eq.s32.totalorder %s81, 0
      %s84 = sadd.s32 %s83, 1
      %s85 = scalar_select %p82, %s83, %s84
      %p88 = pneg %p82
      %p89 = scmp.eq.s32.totalorder %s12, 3
      %p90 = por %p88, %p89
      %p91 = scmp.ne.s32.totalorder %s83, %s86
      %p92 = scmp.eq.s32.totalorder %s12, 0
      %p93 = por %p91, %p92
      %p94 = scmp.ne.s32.totalorder %s83, %s86
      %p95 = scmp.eq.s32.totalorder %s17, 3
      %p96 = por %p94, %p95
      %p97 = scmp.ne.s32.totalorder %s86, %s87
      %p98 = scmp.eq.s32.totalorder %s17, 0
      %p99 = por %p97, %p98
      %p100 = scmp.ne.s32.totalorder %s86, %s87
      %p101 = scmp.eq.s32.totalorder %s18, 3
      %p102 = por %p100, %p101
      %p104 = scmp.ne.s32.totalorder %s87, %s103
      %p105 = scmp.eq.s32.totalorder %s18, 0
      %p106 = por %p104, %p105
      %p107 = scmp.le.s32.totalorder 1, %s12
      %p108 = scmp.lt.s32.totalorder %s12, 5
      %p109 = pnand %p107, %p108
      %p110 = pneg %p109
      // Predicated region
      $region9: #{conv_norm_layer_forward.1} parent=5 // pred_check
        _
      $region10: #{conv_norm_layer_forward.1} parent=5 // pred_check_branch
        %112 = sbr.rel (%p109) target = $region12
      $region11: #{conv_norm_layer_forward.1} parent=5 // pred_region
        %s113 = ssub.s32 %s12, 1
        // Predicated region
        $region13: #{conv_norm_layer_forward.1} parent=11 // pred_check
          %p114 = pneg %p71
        $region14: #{conv_norm_layer_forward.1} parent=11 // pred_check_branch
          %116 = sbr.rel (%p114) target = $region16
        $region15: #{conv_norm_layer_forward.1} parent=11 // pred_region
          %118 = vsyncadd [#allocation4], 0
          %s120 = sshll.u32 %s1, 4
          %s121 = int_to_ptr.vmem [resolvable:$true] %s120
          %123 = dma.vmem_to_smem %s121, 16, [#allocation2], [#allocation4]
        $region16: #{conv_norm_layer_forward.1} parent=11 // pred_fallthru
          _
      $region12: #{conv_norm_layer_forward.1} parent=5 // pred_fallthru
        _
      %p124 = scmp.lt.s32.totalorder %s12, 4
      // Predicated region
      $region17: #{conv_norm_layer_forward.1} parent=5 // pred_check
        %p125 = pneg %p124
      $region18: #{conv_norm_layer_forward.1} parent=5 // pred_check_branch
        %127 = sbr.rel (%p125) target = $region20
      $region19: #{conv_norm_layer_forward.1} parent=5 // pred_region
        // Predicated region
        $region21: #{conv_norm_layer_forward.1} parent=19 // pred_check
          %p128 = pneg %p44
        $region22: #{conv_norm_layer_forward.1} parent=19 // pred_check_branch
          %130 = sbr.rel (%p128) target = $region24
        $region23: #{conv_norm_layer_forward.1} parent=19 // pred_region
          %p131 = scmp.lt.s32.totalorder %s19, 1
          %s132 = scalar_select %p131, %s19, 1
          %s133 = smul.addr %s132, 9
          %s134 = smul.addr %s133, 8
          %s135 = scalar_lea.vmem %s0, %s134
        $region24: #{conv_norm_layer_forward.1} parent=19 // pred_fallthru
          _
      $region20: #{conv_norm_layer_forward.1} parent=5 // pred_fallthru
        _
      %p136 = scmp.le.s32.totalorder 1, %s12
      %p137 = scmp.lt.s32.totalorder %s12, 5
      %p138 = pnand %p136, %p137
      %p139 = pneg %p138
      // Predicated region
      $region25: #{conv_norm_layer_forward.1} parent=5 // pred_check
        _
      $region26: #{conv_norm_layer_forward.1} parent=5 // pred_check_branch
        %141 = sbr.rel (%p138) target = $region28
      $region27: #{conv_norm_layer_forward.1} parent=5 // pred_region
        %s142 = ssub.s32 %s12, 1
        // Predicated region
        $region29: #{conv_norm_layer_forward.1} parent=27 // pred_check
          %p143 = pneg %p71
        $region30: #{conv_norm_layer_forward.1} parent=27 // pred_check_branch
          %145 = sbr.rel (%p143) target = $region32
        $region31: #{conv_norm_layer_forward.1} parent=27 // pred_region
          %147 = dma.done [#allocation4], 16
        $region32: #{conv_norm_layer_forward.1} parent=27 // pred_fallthru
          _
        %148 = sfence
        %p149 = scmp.lt.s32.totalorder %s21, 1
        %s150 = scalar_select %p149, %s21, 1
        %s151 = smul.addr %s150, 9
        %s152 = smul.addr %s151, 8
        %s153 = scalar_lea.vmem %s0, %s152
        %p154 = pneg %p50
        %p155 = pneg %p47
        %p156 = pneg %p71
        %p157 = pneg %p68
        %p158 = pneg %p99
        %p159 = pneg %p96
        %s160 = sand.u32 %s86, 1
        %s161 = scalar_lea.sflag [#allocation3], %s160
        %s162 = sand.u32 %s86, 1
        %s163 = smul.addr %s162, 16
        %s164 = scalar_lea.vmem [#allocation5], %s163
        %p165 = scmp.lt.s32.totalorder %s21, 1
        %s166 = scalar_select %p165, %s21, 1
        %s167 = smul.addr %s166, 9
        %s168 = smul.addr %s167, 8
        %s169 = scalar_lea.vmem %s0, %s168
        %s170 = smul.u32 %s22, 8
        %s171 = scalar_lea.vmem %s169, %s170
        %v172 = vld [vmem:[%s171] sm:$0xff]
        %v173 = vld [vmem:[%s171 + $0x8] sm:$0x3]
        %v174 = vld [vmem:[%s171 + $0x18] sm:$0xff]
        %v175 = vld [vmem:[%s171 + $0x20] sm:$0x3]
        %v176 = vld [vmem:[%s171 + $0x30] sm:$0xff]
        %v177 = vld [vmem:[%s171 + $0x38] sm:$0x3]
        %s178 = sld [smem:[#allocation2]]
        %v179 = vstv %s178
        %v180 = vmul.f32 %v179, %v172
        %v181 = vadd.f32 %v180, 0.0
        %s182 = sld [smem:[#allocation2 + $0x3]]
        %v183 = vstv %s182
        %v184 = vmul.f32 %v183, %v172
        %v185 = vadd.f32 %v184, 0.0
        %s186 = sld [smem:[#allocation2 + $0x1]]
        %v187 = vstv %s186
        %v188 = vmul.f32 %v187, %v174
        %v189 = vadd.f32 %v181, %v188
        %s190 = sld [smem:[#allocation2 + $0x4]]
        %v191 = vstv %s190
        %v192 = vmul.f32 %v191, %v174
        %v193 = vadd.f32 %v185, %v192
        %s194 = sld [smem:[#allocation2 + $0x2]]
        %v195 = vstv %s194
        %v196 = vmul.f32 %v195, %v176
        %v197 = vadd.f32 %v189, %v196
        %s198 = sld [smem:[#allocation2 + $0x5]]
        %v199 = vstv %s198
        %v200 = vmul.f32 %v199, %v176
        %v201 = vadd.f32 %v193, %v200
        %s202 = sld [smem:[#allocation2 + $0x6]]
        %v203 = vstv %s202
        %v204 = vmul.f32 %v203, %v172
        %206 = vrot.lane.b32.xlu0 %v204, 127
        %v207 = vpop.permute.xlu0 %206
        %v209 = vadd.f32 %v197, %v207
        %s210 = sld [smem:[#allocation2 + $0x9]]
        %v211 = vstv %s210
        %v212 = vmul.f32 %v211, %v172
        %214 = vrot.lane.b32.xlu0 %v212, 127
        %v215 = vpop.permute.xlu0 %214
        %v217 = vadd.f32 %v201, %v215
        %s218 = sld [smem:[#allocation2 + $0x7]]
        %v219 = vstv %s218
        %v220 = vmul.f32 %v219, %v174
        %222 = vrot.lane.b32.xlu0 %v220, 127
        %v223 = vpop.permute.xlu0 %222
        %v225 = vadd.f32 %v209, %v223
        %s226 = sld [smem:[#allocation2 + $0xa]]
        %v227 = vstv %s226
        %v228 = vmul.f32 %v227, %v174
        %230 = vrot.lane.b32.xlu0 %v228, 127
        %v231 = vpop.permute.xlu0 %230
        %v233 = vadd.f32 %v217, %v231
        %s234 = sld [smem:[#allocation2 + $0x8]]
        %v235 = vstv %s234
        %v236 = vmul.f32 %v235, %v176
        %238 = vrot.lane.b32.xlu0 %v236, 127
        %v239 = vpop.permute.xlu0 %238
        %v241 = vadd.f32 %v225, %v239
        %s242 = sld [smem:[#allocation2 + $0xb]]
        %v243 = vstv %s242
        %v244 = vmul.f32 %v243, %v176
        %246 = vrot.lane.b32.xlu0 %v244, 127
        %v247 = vpop.permute.xlu0 %246
        %v249 = vadd.f32 %v233, %v247
        %s250 = sld [smem:[#allocation2 + $0xc]]
        %v251 = vstv %s250
        %v252 = vmul.f32 %v251, %v172
        %254 = vrot.lane.b32.xlu0 %v252, 126
        %v255 = vpop.permute.xlu0 %254
        %v257 = vadd.f32 %v241, %v255
        %s258 = sld [smem:[#allocation2 + $0xf]]
        %v259 = vstv %s258
        %v260 = vmul.f32 %v259, %v172
        %262 = vrot.lane.b32.xlu0 %v260, 126
        %v263 = vpop.permute.xlu0 %262
        %v265 = vadd.f32 %v249, %v263
        %s266 = sld [smem:[#allocation2 + $0xd]]
        %v267 = vstv %s266
        %v268 = vmul.f32 %v267, %v174
        %270 = vrot.lane.b32.xlu0 %v268, 126
        %v271 = vpop.permute.xlu0 %270
        %v273 = vadd.f32 %v257, %v271
        %s274 = sld [smem:[#allocation2 + $0x10]]
        %v275 = vstv %s274
        %v276 = vmul.f32 %v275, %v174
        %278 = vrot.lane.b32.xlu0 %v276, 126
        %v279 = vpop.permute.xlu0 %278
        %v281 = vadd.f32 %v265, %v279
        %s282 = sld [smem:[#allocation2 + $0xe]]
        %v283 = vstv %s282
        %v284 = vmul.f32 %v283, %v176
        %286 = vrot.lane.b32.xlu0 %v284, 126
        %v287 = vpop.permute.xlu0 %286
        %v289 = vadd.f32 %v273, %v287
        %s290 = sld [smem:[#allocation2 + $0x11]]
        %v291 = vstv %s290
        %v292 = vmul.f32 %v291, %v176
        %294 = vrot.lane.b32.xlu0 %v292, 126
        %v295 = vpop.permute.xlu0 %294
        %v297 = vadd.f32 %v281, %v295
        %s298 = sld [smem:[#allocation2 + $0x12]]
        %v299 = vstv %s298
        %v300 = vmul.f32 %v299, %v172
        %v301 = vmul.f32 %v299, %v173
        %vm304 = vcmask 1046528
        %v305 = vrot.slane %v300, 1
        %v306 = vrot.slane %v301, 1
        %v307 = vsel %vm304, %v305, %v306
        %v309 = vadd.f32 %v289, %v307
        %s310 = sld [smem:[#allocation2 + $0x15]]
        %v311 = vstv %s310
        %v312 = vmul.f32 %v311, %v172
        %v313 = vmul.f32 %v311, %v173
        %v316 = vrot.slane %v312, 1
        %v317 = vrot.slane %v313, 1
        %v318 = vsel %vm304, %v316, %v317
        %v320 = vadd.f32 %v297, %v318
        %s321 = sld [smem:[#allocation2 + $0x13]]
        %v322 = vstv %s321
        %v323 = vmul.f32 %v322, %v174
        %v324 = vmul.f32 %v322, %v175
        %v327 = vrot.slane %v323, 1
        %v328 = vrot.slane %v324, 1
        %v329 = vsel %vm304, %v327, %v328
        %v331 = vadd.f32 %v309, %v329
        %s332 = sld [smem:[#allocation2 + $0x16]]
        %v333 = vstv %s332
        %v334 = vmul.f32 %v333, %v174
        %v335 = vmul.f32 %v333, %v175
        %v338 = vrot.slane %v334, 1
        %v339 = vrot.slane %v335, 1
        %v340 = vsel %vm304, %v338, %v339
        %v342 = vadd.f32 %v320, %v340
        %s343 = sld [smem:[#allocation2 + $0x14]]
        %v344 = vstv %s343
        %v345 = vmul.f32 %v344, %v176
        %v346 = vmul.f32 %v344, %v177
        %v349 = vrot.slane %v345, 1
        %v350 = vrot.slane %v346, 1
        %v351 = vsel %vm304, %v349, %v350
        %v353 = vadd.f32 %v331, %v351
        %s354 = sld [smem:[#allocation2 + $0x17]]
        %v355 = vstv %s354
        %v356 = vmul.f32 %v355, %v176
        %v357 = vmul.f32 %v355, %v177
        %v360 = vrot.slane %v356, 1
        %v361 = vrot.slane %v357, 1
        %v362 = vsel %vm304, %v360, %v361
        %v364 = vadd.f32 %v342, %v362
        %s365 = sld [smem:[#allocation2 + $0x18]]
        %v366 = vstv %s365
        %v367 = vmul.f32 %v366, %v172
        %v368 = vmul.f32 %v366, %v173
        %v371 = vrot.slane %v367, 1
        %v372 = vrot.slane %v368, 1
        %v373 = vsel %vm304, %v371, %v372
        %374 = vrot.lane.b32.xlu0 %v373, 127
        %v375 = vpop.permute.xlu0 %374
        %v377 = vadd.f32 %v353, %v375
        %s378 = sld [smem:[#allocation2 + $0x1b]]
        %v379 = vstv %s378
        %v380 = vmul.f32 %v379, %v172
        %v381 = vmul.f32 %v379, %v173
        %v384 = vrot.slane %v380, 1
        %v385 = vrot.slane %v381, 1
        %v386 = vsel %vm304, %v384, %v385
        %387 = vrot.lane.b32.xlu0 %v386, 127
        %v388 = vpop.permute.xlu0 %387
        %v390 = vadd.f32 %v364, %v388
        %s391 = sld [smem:[#allocation2 + $0x19]]
        %v392 = vstv %s391
        %v393 = vmul.f32 %v392, %v174
        %v394 = vmul.f32 %v392, %v175
        %v397 = vrot.slane %v393, 1
        %v398 = vrot.slane %v394, 1
        %v399 = vsel %vm304, %v397, %v398
        %400 = vrot.lane.b32.xlu0 %v399, 127
        %v401 = vpop.permute.xlu0 %400
        %v403 = vadd.f32 %v377, %v401
        %s404 = sld [smem:[#allocation2 + $0x1c]]
        %v405 = vstv %s404
        %v406 = vmul.f32 %v405, %v174
        %v407 = vmul.f32 %v405, %v175
        %v410 = vrot.slane %v406, 1
        %v411 = vrot.slane %v407, 1
        %v412 = vsel %vm304, %v410, %v411
        %413 = vrot.lane.b32.xlu0 %v412, 127
        %v414 = vpop.permute.xlu0 %413
        %v416 = vadd.f32 %v390, %v414
        %s417 = sld [smem:[#allocation2 + $0x1a]]
        %v418 = vstv %s417
        %v419 = vmul.f32 %v418, %v176
        %v420 = vmul.f32 %v418, %v177
        %v423 = vrot.slane %v419, 1
        %v424 = vrot.slane %v420, 1
        %v425 = vsel %vm304, %v423, %v424
        %426 = vrot.lane.b32.xlu0 %v425, 127
        %v427 = vpop.permute.xlu0 %426
        %v429 = vadd.f32 %v403, %v427
        %s430 = sld [smem:[#allocation2 + $0x1d]]
        %v431 = vstv %s430
        %v432 = vmul.f32 %v431, %v176
        %v433 = vmul.f32 %v431, %v177
        %v436 = vrot.slane %v432, 1
        %v437 = vrot.slane %v433, 1
        %v438 = vsel %vm304, %v436, %v437
        %439 = vrot.lane.b32.xlu0 %v438, 127
        %v440 = vpop.permute.xlu0 %439
        %v442 = vadd.f32 %v416, %v440
        %s443 = sld [smem:[#allocation2 + $0x1e]]
        %v444 = vstv %s443
        %v445 = vmul.f32 %v444, %v172
        %v446 = vmul.f32 %v444, %v173
        %v449 = vrot.slane %v445, 1
        %v450 = vrot.slane %v446, 1
        %v451 = vsel %vm304, %v449, %v450
        %452 = vrot.lane.b32.xlu0 %v451, 126
        %v453 = vpop.permute.xlu0 %452
        %v455 = vadd.f32 %v429, %v453
        %s456 = sld [smem:[#allocation2 + $0x21]]
        %v457 = vstv %s456
        %v458 = vmul.f32 %v457, %v172
        %v459 = vmul.f32 %v457, %v173
        %v462 = vrot.slane %v458, 1
        %v463 = vrot.slane %v459, 1
        %v464 = vsel %vm304, %v462, %v463
        %465 = vrot.lane.b32.xlu0 %v464, 126
        %v466 = vpop.permute.xlu0 %465
        %v468 = vadd.f32 %v442, %v466
        %s469 = sld [smem:[#allocation2 + $0x1f]]
        %v470 = vstv %s469
        %v471 = vmul.f32 %v470, %v174
        %v472 = vmul.f32 %v470, %v175
        %v475 = vrot.slane %v471, 1
        %v476 = vrot.slane %v472, 1
        %v477 = vsel %vm304, %v475, %v476
        %478 = vrot.lane.b32.xlu0 %v477, 126
        %v479 = vpop.permute.xlu0 %478
        %v481 = vadd.f32 %v455, %v479
        %s482 = sld [smem:[#allocation2 + $0x22]]
        %v483 = vstv %s482
        %v484 = vmul.f32 %v483, %v174
        %v485 = vmul.f32 %v483, %v175
        %v488 = vrot.slane %v484, 1
        %v489 = vrot.slane %v485, 1
        %v490 = vsel %vm304, %v488, %v489
        %491 = vrot.lane.b32.xlu0 %v490, 126
        %v492 = vpop.permute.xlu0 %491
        %v494 = vadd.f32 %v468, %v492
        %s495 = sld [smem:[#allocation2 + $0x20]]
        %v496 = vstv %s495
        %v497 = vmul.f32 %v496, %v176
        %v498 = vmul.f32 %v496, %v177
        %v501 = vrot.slane %v497, 1
        %v502 = vrot.slane %v498, 1
        %v503 = vsel %vm304, %v501, %v502
        %504 = vrot.lane.b32.xlu0 %v503, 126
        %v505 = vpop.permute.xlu0 %504
        %v507 = vadd.f32 %v481, %v505
        %s508 = sld [smem:[#allocation2 + $0x23]]
        %v509 = vstv %s508
        %v510 = vmul.f32 %v509, %v176
        %v511 = vmul.f32 %v509, %v177
        %v514 = vrot.slane %v510, 1
        %v515 = vrot.slane %v511, 1
        %v516 = vsel %vm304, %v514, %v515
        %517 = vrot.lane.b32.xlu0 %v516, 126
        %v518 = vpop.permute.xlu0 %517
        %v520 = vadd.f32 %v494, %v518
        %s521 = sld [smem:[#allocation2 + $0x24]]
        %v522 = vstv %s521
        %v523 = vmul.f32 %v522, %v172
        %v524 = vmul.f32 %v522, %v173
        %vm527 = vcmask 1045504
        %v528 = vrot.slane %v523, 2
        %v529 = vrot.slane %v524, 2
        %v530 = vsel %vm527, %v528, %v529
        %v532 = vadd.f32 %v507, %v530
        %s533 = sld [smem:[#allocation2 + $0x27]]
        %v534 = vstv %s533
        %v535 = vmul.f32 %v534, %v172
        %v536 = vmul.f32 %v534, %v173
        %v539 = vrot.slane %v535, 2
        %v540 = vrot.slane %v536, 2
        %v541 = vsel %vm527, %v539, %v540
        %v543 = vadd.f32 %v520, %v541
        %s544 = sld [smem:[#allocation2 + $0x25]]
        %v545 = vstv %s544
        %v546 = vmul.f32 %v545, %v174
        %v547 = vmul.f32 %v545, %v175
        %v550 = vrot.slane %v546, 2
        %v551 = vrot.slane %v547, 2
        %v552 = vsel %vm527, %v550, %v551
        %v554 = vadd.f32 %v532, %v552
        %s555 = sld [smem:[#allocation2 + $0x28]]
        %v556 = vstv %s555
        %v557 = vmul.f32 %v556, %v174
        %v558 = vmul.f32 %v556, %v175
        %v561 = vrot.slane %v557, 2
        %v562 = vrot.slane %v558, 2
        %v563 = vsel %vm527, %v561, %v562
        %v565 = vadd.f32 %v543, %v563
        %s566 = sld [smem:[#allocation2 + $0x26]]
        %v567 = vstv %s566
        %v568 = vmul.f32 %v567, %v176
        %v569 = vmul.f32 %v567, %v177
        %v572 = vrot.slane %v568, 2
        %v573 = vrot.slane %v569, 2
        %v574 = vsel %vm527, %v572, %v573
        %v576 = vadd.f32 %v554, %v574
        %s577 = sld [smem:[#allocation2 + $0x29]]
        %v578 = vstv %s577
        %v579 = vmul.f32 %v578, %v176
        %v580 = vmul.f32 %v578, %v177
        %v583 = vrot.slane %v579, 2
        %v584 = vrot.slane %v580, 2
        %v585 = vsel %vm527, %v583, %v584
        %v587 = vadd.f32 %v565, %v585
        %s588 = sld [smem:[#allocation2 + $0x2a]]
        %v589 = vstv %s588
        %v590 = vmul.f32 %v589, %v172
        %v591 = vmul.f32 %v589, %v173
        %v594 = vrot.slane %v590, 2
        %v595 = vrot.slane %v591, 2
        %v596 = vsel %vm527, %v594, %v595
        %597 = vrot.lane.b32.xlu0 %v596, 127
        %v598 = vpop.permute.xlu0 %597
        %v600 = vadd.f32 %v576, %v598
        %s601 = sld [smem:[#allocation2 + $0x2d]]
        %v602 = vstv %s601
        %v603 = vmul.f32 %v602, %v172
        %v604 = vmul.f32 %v602, %v173
        %v607 = vrot.slane %v603, 2
        %v608 = vrot.slane %v604, 2
        %v609 = vsel %vm527, %v607, %v608
        %610 = vrot.lane.b32.xlu0 %v609, 127
        %v611 = vpop.permute.xlu0 %610
        %v613 = vadd.f32 %v587, %v611
        %s614 = sld [smem:[#allocation2 + $0x2b]]
        %v615 = vstv %s614
        %v616 = vmul.f32 %v615, %v174
        %v617 = vmul.f32 %v615, %v175
        %v620 = vrot.slane %v616, 2
        %v621 = vrot.slane %v617, 2
        %v622 = vsel %vm527, %v620, %v621
        %623 = vrot.lane.b32.xlu0 %v622, 127
        %v624 = vpop.permute.xlu0 %623
        %v626 = vadd.f32 %v600, %v624
        %s627 = sld [smem:[#allocation2 + $0x2e]]
        %v628 = vstv %s627
        %v629 = vmul.f32 %v628, %v174
        %v630 = vmul.f32 %v628, %v175
        %v633 = vrot.slane %v629, 2
        %v634 = vrot.slane %v630, 2
        %v635 = vsel %vm527, %v633, %v634
        %636 = vrot.lane.b32.xlu0 %v635, 127
        %v637 = vpop.permute.xlu0 %636
        %v639 = vadd.f32 %v613, %v637
        %s640 = sld [smem:[#allocation2 + $0x2c]]
        %v641 = vstv %s640
        %v642 = vmul.f32 %v641, %v176
        %v643 = vmul.f32 %v641, %v177
        %v646 = vrot.slane %v642, 2
        %v647 = vrot.slane %v643, 2
        %v648 = vsel %vm527, %v646, %v647
        %649 = vrot.lane.b32.xlu0 %v648, 127
        %v650 = vpop.permute.xlu0 %649
        %v652 = vadd.f32 %v626, %v650
        %s653 = sld [smem:[#allocation2 + $0x2f]]
        %v654 = vstv %s653
        %v655 = vmul.f32 %v654, %v176
        %v656 = vmul.f32 %v654, %v177
        %v659 = vrot.slane %v655, 2
        %v660 = vrot.slane %v656, 2
        %v661 = vsel %vm527, %v659, %v660
        %662 = vrot.lane.b32.xlu0 %v661, 127
        %v663 = vpop.permute.xlu0 %662
        %v665 = vadd.f32 %v639, %v663
        %s666 = sld [smem:[#allocation2 + $0x30]]
        %v667 = vstv %s666
        %v668 = vmul.f32 %v667, %v172
        %v669 = vmul.f32 %v667, %v173
        %v672 = vrot.slane %v668, 2
        %v673 = vrot.slane %v669, 2
        %v674 = vsel %vm527, %v672, %v673
        %675 = vrot.lane.b32.xlu0 %v674, 126
        %v676 = vpop.permute.xlu0 %675
        %v678 = vadd.f32 %v652, %v676
        %s679 = sld [smem:[#allocation2 + $0x33]]
        %v680 = vstv %s679
        %v681 = vmul.f32 %v680, %v172
        %v682 = vmul.f32 %v680, %v173
        %v685 = vrot.slane %v681, 2
        %v686 = vrot.slane %v682, 2
        %v687 = vsel %vm527, %v685, %v686
        %688 = vrot.lane.b32.xlu0 %v687, 126
        %v689 = vpop.permute.xlu0 %688
        %v691 = vadd.f32 %v665, %v689
        %s692 = sld [smem:[#allocation2 + $0x31]]
        %v693 = vstv %s692
        %v694 = vmul.f32 %v693, %v174
        %v695 = vmul.f32 %v693, %v175
        %v698 = vrot.slane %v694, 2
        %v699 = vrot.slane %v695, 2
        %v700 = vsel %vm527, %v698, %v699
        %701 = vrot.lane.b32.xlu0 %v700, 126
        %v702 = vpop.permute.xlu0 %701
        %v704 = vadd.f32 %v678, %v702
        %s705 = sld [smem:[#allocation2 + $0x34]]
        %v706 = vstv %s705
        %v707 = vmul.f32 %v706, %v174
        %v708 = vmul.f32 %v706, %v175
        %v711 = vrot.slane %v707, 2
        %v712 = vrot.slane %v708, 2
        %v713 = vsel %vm527, %v711, %v712
        %714 = vrot.lane.b32.xlu0 %v713, 126
        %v715 = vpop.permute.xlu0 %714
        %v717 = vadd.f32 %v691, %v715
        %s718 = sld [smem:[#allocation2 + $0x32]]
        %v719 = vstv %s718
        %v720 = vmul.f32 %v719, %v176
        %v721 = vmul.f32 %v719, %v177
        %v724 = vrot.slane %v720, 2
        %v725 = vrot.slane %v721, 2
        %v726 = vsel %vm527, %v724, %v725
        %727 = vrot.lane.b32.xlu0 %v726, 126
        %v728 = vpop.permute.xlu0 %727
        %v730 = vadd.f32 %v704, %v728
        %s731 = sld [smem:[#allocation2 + $0x35]]
        %v732 = vstv %s731
        %v733 = vmul.f32 %v732, %v176
        %v734 = vmul.f32 %v732, %v177
        %v737 = vrot.slane %v733, 2
        %v738 = vrot.slane %v734, 2
        %v739 = vsel %vm527, %v737, %v738
        %740 = vrot.lane.b32.xlu0 %v739, 126
        %v741 = vpop.permute.xlu0 %740
        %v743 = vadd.f32 %v717, %v741
        %vm744 = vcmask 130048
        %745 = vst.msk [vmem:[%s164] sm:$0xff] %vm744, %v730
        %s746 = scalar_lea.vmem %s164, 8 [#allocation5]
        %747 = vst.msk [vmem:[%s746] sm:$0xff] %vm744, %v743
        %s748 = sand.u32 %s86, 1
        %s749 = scalar_lea.sflag [#allocation3], %s748
        %s750 = sand.u32 %s86, 1
        %s751 = smul.addr %s750, 16
        %s752 = scalar_lea.vmem [#allocation5], %s751
        // Predicated region
        $region33: #{conv_norm_layer_forward.1} parent=27 // pred_check
          %p753 = pneg %p96
        $region34: #{conv_norm_layer_forward.1} parent=27 // pred_check_branch
          %755 = sbr.rel (%p753) target = $region36
        $region35: #{conv_norm_layer_forward.1} parent=27 // pred_region
          %757 = vsyncadd %s749, 0
          %s758 = smul.addr %s21, 4
          %s759 = sadd.s32 %s22, %s758
          %s760 = smul.addr %s759, 8
          %s761 = scalar_lea.hbm %s2, %s760
          %s762 = sshll.u32 %s752, 4
          %s763 = int_to_ptr.vmem [resolvable:$true] %s762
          %s764 = sshll.u32 %s761, 4
          %s765 = int_to_ptr.hbm [resolvable:$true] %s764
          %770 = dma.vmem_to_hbm [thread:$0]  %s763, 256, %s765, %s749, 128, 256, 8
        $region36: #{conv_norm_layer_forward.1} parent=27 // pred_fallthru
          _
      $region28: #{conv_norm_layer_forward.1} parent=5 // pred_fallthru
        _
      %p771 = scmp.le.s32.totalorder 2, %s12
      // Predicated region
      $region37: #{conv_norm_layer_forward.1} parent=5 // pred_check
        %p772 = pneg %p771
      $region38: #{conv_norm_layer_forward.1} parent=5 // pred_check_branch
        %774 = sbr.rel (%p772) target = $region40
      $region39: #{conv_norm_layer_forward.1} parent=5 // pred_region
        %s775 = ssub.s32 %s12, 2
        // Predicated region
        $region41: #{conv_norm_layer_forward.1} parent=39 // pred_check
          %p776 = pneg %p102
        $region42: #{conv_norm_layer_forward.1} parent=39 // pred_check_branch
          %778 = sbr.rel (%p776) target = $region44
        $region43: #{conv_norm_layer_forward.1} parent=39 // pred_region
          %s779 = sand.u32 %s87, 1
          %s780 = scalar_lea.sflag [#allocation3], %s779
          %s781 = sand.u32 %s87, 1
          %s782 = smul.addr %s781, 16
          %s783 = scalar_lea.vmem [#allocation5], %s782
          %785 = dma.done %s780, 256
        $region44: #{conv_norm_layer_forward.1} parent=39 // pred_fallthru
          _
      $region40: #{conv_norm_layer_forward.1} parent=5 // pred_fallthru
        _
    $region6: #{conv_norm_layer_forward.1} parent=1 // loop_footer
      %s16 = sadd.s32 1, %s12
    $region7: #{conv_norm_layer_forward.1} parent=1 // loop_footer_branch
      %11 = sbr.rel target = $region3
    $region8: #{conv_norm_layer_forward.1} parent=1 // loop_exit
      _
    %786 = vsyncpa [#allocation3], 1
    %s787 = scalar_lea.sflag [#allocation3], 1
    %788 = vsyncpa %s787, 1
    %789 = vsyncpa [#allocation4], 1
    %s790 = scalar_lea.sflag [#allocation4], 1
    %791 = vsyncpa %s790, 1

</llo_original>
